<compile_context>
chip_gen: v5e
topology: v5e:2x2
jax: 0.10.0
libtpu: 0.0.40
codegen_flags: <defaults>
</compile_context>

<pallas_src>
import functools
import math

import jax
import jax.numpy as jnp
from jax.experimental import pallas as pl
from jax.experimental.pallas import tpu as pltpu


# ------------------------------ helpers -------------------------------------

def _pick_tile(n, target=256):
    """Largest convenient token tile <= target that divides n (fallback: n)."""
    if n <= target:
        return n
    for t in (target, 128, 64, 32, 16, 8):
        if n % t == 0:
            return t
    return n


def _cparams(semantics):
    # Explicit VMEM limit; 48 MiB is safe on v7x (64 MiB physical) and below
    # the 128 MiB of v5e/v6e while raising the small scoped defaults.
    return pltpu.CompilerParams(dimension_semantics=semantics,
                                vmem_limit_bytes=48 * 1024 * 1024)


# ----------------------------- Pallas kernels -------------------------------

def _layernorm_kernel(x_ref, g_ref, b_ref, o_ref):
    x = x_ref[...]
    mu = jnp.mean(x, axis=-1, keepdims=True)
    var = jnp.mean(jnp.square(x - mu), axis=-1, keepdims=True)
    o_ref[...] = (x - mu) * jax.lax.rsqrt(var + 1e-5) * g_ref[...] + b_ref[...]


def _ln_linear_kernel(x_ref, g_ref, b_ref, w_ref, bias_ref, o_ref):
    # Fused pre-LN + linear projection; LN stats in f32, MXU operands bf16.
    x = x_ref[...]
    mu = jnp.mean(x, axis=-1, keepdims=True)
    var = jnp.mean(jnp.square(x - mu), axis=-1, keepdims=True)
    h = (x - mu) * jax.lax.rsqrt(var + 1e-5) * g_ref[...] + b_ref[...]
    o_ref[...] = (jnp.dot(h.astype(jnp.bfloat16), w_ref[...],
                          preferred_element_type=jnp.float32) + bias_ref[...])


def _residual_linear_kernel(a_ref, w_ref, bias_ref, res_ref, o_ref):
    # out = residual + a @ W + b   (attention output projection, fused residual)
    o_ref[...] = (res_ref[...]
                  + jnp.dot(a_ref[...].astype(jnp.bfloat16), w_ref[...],
                            preferred_element_type=jnp.float32)
                  + bias_ref[...])


def _ln_ffn_kernel(x_ref, g_ref, b_ref, w1_ref, b1_ref, w2_ref, b2_ref, o_ref):
    # out = x + gelu(LN(x) @ W1 + b1) @ W2 + b2   (LN2 + FFN + residual fused)
    x = x_ref[...]
    mu = jnp.mean(x, axis=-1, keepdims=True)
    var = jnp.mean(jnp.square(x - mu), axis=-1, keepdims=True)
    h = (x - mu) * jax.lax.rsqrt(var + 1e-5) * g_ref[...] + b_ref[...]
    u = (jnp.dot(h.astype(jnp.bfloat16), w1_ref[...],
                 preferred_element_type=jnp.float32) + b1_ref[...])
    # TODO(synk): ESM uses exact erf-GELU; tanh-approximate GELU (f32 math) here.
    u = 0.5 * u * (1.0 + jnp.tanh(0.7978845608028654 *
                                  (u + 0.044715 * u * u * u)))
    o_ref[...] = (x
                  + jnp.dot(u.astype(jnp.bfloat16), w2_ref[...],
                            preferred_element_type=jnp.float32)
                  + b2_ref[...])


def _flash_attn_kernel(q_ref, k_ref, v_ref, o_ref, m_ref, l_ref, acc_ref,
                       *, scale):
    # grid = (B*H, q_tiles, kv_tiles); kv is the innermost reduction axis.
    ki = pl.program_id(2)

    @pl.when(ki == 0)
    def _():
        m_ref[...] = jnp.full_like(m_ref, -jnp.inf)
        l_ref[...] = jnp.zeros_like(l_ref)
        acc_ref[...] = jnp.zeros_like(acc_ref)

    q = q_ref[0].astype(jnp.bfloat16)                       # (tq, Dh)
    k = k_ref[0].astype(jnp.bfloat16)                       # (tkv, Dh)
    v = v_ref[0].astype(jnp.bfloat16)                       # (tkv, Dh)
    s = jax.lax.dot_general(q, k, (((1,), (1,)), ((), ())),
                            preferred_element_type=jnp.float32) * scale
    m_new = jnp.maximum(m_ref[...], jnp.max(s, axis=-1, keepdims=True))
    alpha = jnp.exp(m_ref[...] - m_new)
    p = jnp.exp(s - m_new)
    l_ref[...] = alpha * l_ref[...] + jnp.sum(p, axis=-1, keepdims=True)
    acc_ref[...] = alpha * acc_ref[...] + jnp.dot(
        p.astype(jnp.bfloat16), v, preferred_element_type=jnp.float32)
    m_ref[...] = m_new

    @pl.when(ki == pl.num_programs(2) - 1)
    def _():
        o_ref[0] = acc_ref[...] * pl.reciprocal(l_ref[...], approx=True)


def _lm_head_kernel(h_ref, w_ref, o_ref):
    o_ref[...] = jnp.dot(h_ref[...].astype(jnp.bfloat16), w_ref[...],
                         preferred_element_type=jnp.float32)


def _lm_head_ce_kernel(h_ref, w_ref, lbl_ref, logits_ref, loss_ref, cnt_ref,
                       *, valid_v):
    # Lane-dense logits (vocab padded to a multiple of 128) + per-token CE.
    logits = jnp.dot(h_ref[...].astype(jnp.bfloat16), w_ref[...],
                     preferred_element_type=jnp.float32)            # (tm, Vp)
    logits_ref[...] = logits
    cols = jax.lax.broadcasted_iota(jnp.int32, logits.shape, 1)
    masked = jnp.where(cols < valid_v, logits, jnp.float32(-1e30))  # kill pad cols
    labels = lbl_ref[...]                                           # (tm, 1) int32
    valid = labels != -100
    safe = jnp.where(valid, labels, 0)
    picked = jnp.sum(jnp.where(cols == safe, masked, 0.0),
                     axis=-1, keepdims=True)                        # (tm, 1)
    m = jnp.max(masked, axis=-1, keepdims=True)
    lse = m + jnp.log(jnp.sum(jnp.exp(masked - m), axis=-1, keepdims=True))
    validf = valid.astype(jnp.float32)
    loss_ref[...] = (lse - picked) * validf                         # per-token loss
    cnt_ref[...] = validf                                           # per-token count


# ------------------------------ wrappers -------------------------------------

def layer_norm(x, g, b, tm):
    M, D = x.shape
    return pl.pallas_call(
        _layernorm_kernel,
        out_shape=jax.ShapeDtypeStruct((M, D), jnp.float32),
        grid=(M // tm,),
        in_specs=[pl.BlockSpec((tm, D), lambda i: (i, 0)),
                  pl.BlockSpec((1, D), lambda i: (0, 0)),
                  pl.BlockSpec((1, D), lambda i: (0, 0))],
        out_specs=pl.BlockSpec((tm, D), lambda i: (i, 0)),
        compiler_params=_cparams(("parallel",)),
    )(x, g, b)


def ln_linear(x, g, b, w, bias, tm):
    M, D = x.shape
    N = w.shape[1]
    return pl.pallas_call(
        _ln_linear_kernel,
        out_shape=jax.ShapeDtypeStruct((M, N), jnp.float32),
        grid=(M // tm,),
        in_specs=[pl.BlockSpec((tm, D), lambda i: (i, 0)),
                  pl.BlockSpec((1, D), lambda i: (0, 0)),
                  pl.BlockSpec((1, D), lambda i: (0, 0)),
                  pl.BlockSpec((D, N), lambda i: (0, 0)),   # weight resident
                  pl.BlockSpec((1, N), lambda i: (0, 0))],
        out_specs=pl.BlockSpec((tm, N), lambda i: (i, 0)),
        compiler_params=_cparams(("parallel",)),
    )(x, g, b, w, bias)


def residual_linear(a, w, bias, res, tm):
    M, D = a.shape
    N = w.shape[1]
    return pl.pallas_call(
        _residual_linear_kernel,
        out_shape=jax.ShapeDtypeStruct((M, N), jnp.float32),
        grid=(M // tm,),
        in_specs=[pl.BlockSpec((tm, D), lambda i: (i, 0)),
                  pl.BlockSpec((D, N), lambda i: (0, 0)),
                  pl.BlockSpec((1, N), lambda i: (0, 0)),
                  pl.BlockSpec((tm, N), lambda i: (i, 0))],
        out_specs=pl.BlockSpec((tm, N), lambda i: (i, 0)),
        compiler_params=_cparams(("parallel",)),
    )(a, w, bias, res)


def ln_ffn(x, g, b, w1, b1, w2, b2, tm):
    M, D = x.shape
    F = w1.shape[1]
    return pl.pallas_call(
        _ln_ffn_kernel,
        out_shape=jax.ShapeDtypeStruct((M, D), jnp.float32),
        grid=(M // tm,),
        in_specs=[pl.BlockSpec((tm, D), lambda i: (i, 0)),
                  pl.BlockSpec((1, D), lambda i: (0, 0)),
                  pl.BlockSpec((1, D), lambda i: (0, 0)),
                  pl.BlockSpec((D, F), lambda i: (0, 0)),
                  pl.BlockSpec((1, F), lambda i: (0, 0)),
                  pl.BlockSpec((F, D), lambda i: (0, 0)),
                  pl.BlockSpec((1, D), lambda i: (0, 0))],
        out_specs=pl.BlockSpec((tm, D), lambda i: (i, 0)),
        compiler_params=_cparams(("parallel",)),
    )(x, g, b, w1, b1, w2, b2)


def flash_attention(q, k, v, scale, tq, tkv):
    BH, L, Dh = q.shape
    return pl.pallas_call(
        functools.partial(_flash_attn_kernel, scale=scale),
        out_shape=jax.ShapeDtypeStruct((BH, L, Dh), jnp.float32),
        grid=(BH, L // tq, L // tkv),
        in_specs=[pl.BlockSpec((1, tq, Dh), lambda bh, qi, ki: (bh, qi, 0)),
                  pl.BlockSpec((1, tkv, Dh), lambda bh, qi, ki: (bh, ki, 0)),
                  pl.BlockSpec((1, tkv, Dh), lambda bh, qi, ki: (bh, ki, 0))],
        out_specs=pl.BlockSpec((1, tq, Dh), lambda bh, qi, ki: (bh, qi, 0)),
        scratch_shapes=[pltpu.VMEM((tq, 1), jnp.float32),
                        pltpu.VMEM((tq, 1), jnp.float32),
                        pltpu.VMEM((tq, Dh), jnp.float32)],
        compiler_params=_cparams(("parallel", "parallel", "arbitrary")),
    )(q, k, v)


def lm_head_and_ce(hidden, w_lm, labels2d=None, *, tm_target=256):
    # hidden: (M, D) f32, w_lm: (D, V) bf16, labels2d: (M, 1) int32 or None.
    M, D = hidden.shape
    V = w_lm.shape[1]
    Vp = pl.cdiv(V, 128) * 128                 # lane-dense logits
    tm = tm_target if M >= tm_target else M
    Mp = pl.cdiv(M, tm) * tm                   # pad tokens so the grid covers M
    w_p = jnp.pad(w_lm, ((0, 0), (0, Vp - V)))
    h_p = jnp.pad(hidden, ((0, Mp - M), (0, 0)))
    grid = (Mp // tm,)

    if labels2d is None:
        logits_p = pl.pallas_call(
            _lm_head_kernel,
            out_shape=jax.ShapeDtypeStruct((Mp, Vp), jnp.float32),
            grid=grid,
            in_specs=[pl.BlockSpec((tm, D), lambda i: (i, 0)),
                      pl.BlockSpec((D, Vp), lambda i: (0, 0))],
            out_specs=pl.BlockSpec((tm, Vp), lambda i: (i, 0)),
            compiler_params=_cparams(("parallel",)),
        )(h_p, w_p)
        return logits_p[:M, :V], None

    lbl_p = jnp.pad(labels2d, ((0, Mp - M), (0, 0)), constant_values=-100)
    logits_p, per_tok, per_cnt = pl.pallas_call(
        functools.partial(_lm_head_ce_kernel, valid_v=V),
        out_shape=(jax.ShapeDtypeStruct((Mp, Vp), jnp.float32),
                   jax.ShapeDtypeStruct((Mp, 1), jnp.float32),
                   jax.ShapeDtypeStruct((Mp, 1), jnp.float32)),
        grid=grid,
        in_specs=[pl.BlockSpec((tm, D), lambda i: (i, 0)),
                  pl.BlockSpec((D, Vp), lambda i: (0, 0)),
                  pl.BlockSpec((tm, 1), lambda i: (i, 0))],
        out_specs=(pl.BlockSpec((tm, Vp), lambda i: (i, 0)),
                   pl.BlockSpec((tm, 1), lambda i: (i, 0)),
                   pl.BlockSpec((tm, 1), lambda i: (i, 0))),
        compiler_params=_cparams(("parallel",)),
    )(h_p, w_p, lbl_p)
    # mean over non-ignored tokens (padded rows have label -100 -> contribute 0)
    loss = jnp.sum(per_tok) / jnp.sum(per_cnt)
    return logits_p[:M, :V], loss


# ----------------------------- model forward ---------------------------------

def esm_encoder_forward(params, input_ids):
    B, L = input_ids.shape
    D = params['embed_tokens'].shape[1]
    H = params['num_heads']
    Dh = D // H
    M = B * L

    # TODO(synk): ESM padding-token handling (attention_mask) omitted; inputs
    # are assumed to contain no padding tokens.
    x = jnp.take(params['embed_tokens'], input_ids, axis=0)      # (B, L, D)
    x = x + params['embed_positions'][:L][None, :, :]
    x = x.reshape(M, D).astype(jnp.float32)

    tm = _pick_tile(M, 256)
    tq = _pick_tile(L, 256)
    tkv = _pick_tile(L, 512)
    scale = 1.0 / math.sqrt(Dh)

    for lyr in params['layers']:
        # --- self-attention block: fused pre-LN + single (D,3D) QKV matmul ---
        qkv = ln_linear(x, lyr['ln1_g'], lyr['ln1_b'],
                        lyr['wqkv'], lyr['bqkv'], tm)             # (M, 3D)
        # TODO(synk): head split/merge still done as XLA transposes; could be
        # folded into the attention index_maps to save two HBM passes.
        qkv = qkv.reshape(B, L, 3, H, Dh)
        q = qkv[:, :, 0].transpose(0, 2, 1, 3).reshape(B * H, L, Dh)
        k = qkv[:, :, 1].transpose(0, 2, 1, 3).reshape(B * H, L, Dh)
        v = qkv[:, :, 2].transpose(0, 2, 1, 3).reshape(B * H, L, Dh)
        a = flash_attention(q, k, v, scale, tq, tkv)              # (B*H, L, Dh)
        a = a.reshape(B, H, L, Dh).transpose(0, 2, 1, 3).reshape(M, D)
        x = residual_linear(a, lyr['wo'], lyr['bo'], x, tm)       # + residual
        # --- feed-forward block: fused pre-LN + FFN + residual ---
        x = ln_ffn(x, lyr['ln2_g'], lyr['ln2_b'],
                   lyr['w1'], lyr['b1'], lyr['w2'], lyr['b2'], tm)

    return layer_norm(x, params['ln_f_g'], params['ln_f_b'], tm)  # (M, D)


def esm_for_masked_lm_forward(params, input_ids, labels=None):
    """Returns (logits (B, L, V), loss scalar-or-None) — same as the module."""
    B, L = input_ids.shape
    hidden = esm_encoder_forward(params, input_ids)               # (B*L, D)
    labels2d = None
    if labels is not None:
        labels2d = labels.reshape(B * L, 1).astype(jnp.int32)
    logits, loss = lm_head_and_ce(hidden, params['lm_head_w'], labels2d)
    return logits.reshape(B, L, -1), loss


# ----------------------------- parameter init --------------------------------

def init_params(key, *, vocab, max_len, d, h, f, nl):
    keys = jax.random.split(key, 4 + nl)

    def nrm(k, shape, dtype=jnp.float32):
        return (0.02 * jax.random.normal(k, shape)).astype(dtype)

    params = {
        'num_heads': h,
        'embed_tokens': nrm(keys[0], (vocab, d)),
        'embed_positions': nrm(keys[1], (max_len, d)),
        'ln_f_g': jnp.ones((1, d), jnp.float32),
        'ln_f_b': jnp.zeros((1, d), jnp.float32),
        # nn.Linear(hidden, vocab, bias=False); stored (in, out), bf16 operand
        'lm_head_w': nrm(keys[2], (d, vocab), jnp.bfloat16),
        'layers': [],
    }
    for li in range(nl):
        lk = jax.random.split(keys[4 + li], 4)
        params['layers'].append({
            'ln1_g': jnp.ones((1, d), jnp.float32),
            'ln1_b': jnp.zeros((1, d), jnp.float32),
            'wqkv': nrm(lk[0], (d, 3 * d), jnp.bfloat16),
            'bqkv': jnp.zeros((1, 3 * d), jnp.float32),
            'wo': nrm(lk[1], (d, d), jnp.bfloat16),
            'bo': jnp.zeros((1, d), jnp.float32),
            'ln2_g': jnp.ones((1, d), jnp.float32),
            'ln2_b': jnp.zeros((1, d), jnp.float32),
            'w1': nrm(lk[2], (d, f), jnp.bfloat16),
            'b1': jnp.zeros((1, f), jnp.float32),
            'w2': nrm(lk[3], (f, d), jnp.bfloat16),
            'b2': jnp.zeros((1, d), jnp.float32),
        })
    return params


# --------------------------------- main ---------------------------------------

if __name__ == "__main__":
    VOCAB, D, H, FFN_DIM, NUM_LAYERS = 33, 32, 4, 64, 2
    B, L = 2, 8

    key = jax.random.PRNGKey(0)
    kp, kid, klb, kmask = jax.random.split(key, 4)

    params = init_params(kp, vocab=VOCAB, max_len=L, d=D, h=H,
                         f=FFN_DIM, nl=NUM_LAYERS)

    input_ids = jax.random.randint(kid, (B, L), 4, VOCAB, dtype=jnp.int32)
    labels = jax.random.randint(klb, (B, L), 0, VOCAB, dtype=jnp.int32)
    keep = jax.random.bernoulli(kmask, 0.5, (B, L))
    labels = jnp.where(keep, labels, -100)
    labels = labels.at[0, 0].set(5)   # guarantee >=1 supervised token

    logits, loss = esm_for_masked_lm_forward(params, input_ids, labels)
    jax.block_until_ready((logits, loss))
    assert logits.shape == (B, L, VOCAB)
    assert loss.shape == ()
    assert bool(jnp.isfinite(loss))

    # labels=None path: logits only, CE reduction skipped entirely.
    logits2, loss2 = esm_for_masked_lm_forward(params, input_ids, labels=None)
    jax.block_until_ready(logits2)
    assert logits2.shape == (B, L, VOCAB)
    assert loss2 is None

    print("KERNEL_OK")
</pallas_src>

<mosaic_0001>
module attributes {stable_mosaic.version = 11 : i64} {
  func.func @_ln_linear_kernel(%arg0: i32, %arg1: memref<16x32xf32, #tpu.memory_space<vmem>>, %arg2: memref<1x32xf32, #tpu.memory_space<vmem>>, %arg3: memref<1x32xf32, #tpu.memory_space<vmem>>, %arg4: memref<32x96xbf16, #tpu.memory_space<vmem>>, %arg5: memref<1x96xf32, #tpu.memory_space<vmem>>, %arg6: memref<16x96xf32, #tpu.memory_space<vmem>>) attributes {dimension_semantics = [#tpu.dimension_semantics<parallel>], iteration_bounds = array<i64: 1>, scalar_prefetch = 0 : i64, scratch_operands = 0 : i64, tpu.core_type = #tpu.core_type<tc>, window_params = [{transform_indices = @transform_0, window_bounds = array<i64: 16, 32>}, {pipeline_mode = #tpu.pipeline_mode<synchronous>, transform_indices = @transform_1, window_bounds = array<i64: 1, 32>}, {pipeline_mode = #tpu.pipeline_mode<synchronous>, transform_indices = @transform_2, window_bounds = array<i64: 1, 32>}, {pipeline_mode = #tpu.pipeline_mode<synchronous>, transform_indices = @transform_3, window_bounds = array<i64: 32, 96>}, {pipeline_mode = #tpu.pipeline_mode<synchronous>, transform_indices = @transform_4, window_bounds = array<i64: 1, 96>}, {transform_indices = @transform_5, window_bounds = array<i64: 16, 96>}]} {
    %c0 = arith.constant 0 : index
    %c0_0 = arith.constant 0 : index
    %0 = vector.load %arg1[%c0, %c0_0] : memref<16x32xf32, #tpu.memory_space<vmem>>, vector<16x32xf32>
    %cst = arith.constant dense<0.000000e+00> : vector<16xf32>
    %1 = vector.multi_reduction <add>, %0, %cst [1] : vector<16x32xf32> to vector<16xf32>
    %2 = vector.shape_cast %1 : vector<16xf32> to vector<16x1xf32>
    %cst_1 = arith.constant 3.200000e+01 : f32
    %3 = vector.broadcast %cst_1 : f32 to vector<16x1xf32>
    %4 = arith.divf %2, %3 : vector<16x1xf32>
    %5 = vector.broadcast %4 : vector<16x1xf32> to vector<16x32xf32>
    %6 = arith.subf %0, %5 : vector<16x32xf32>
    %7 = arith.mulf %6, %6 : vector<16x32xf32>
    %cst_2 = arith.constant dense<0.000000e+00> : vector<16xf32>
    %8 = vector.multi_reduction <add>, %7, %cst_2 [1] : vector<16x32xf32> to vector<16xf32>
    %9 = vector.shape_cast %8 : vector<16xf32> to vector<16x1xf32>
    %cst_3 = arith.constant 3.200000e+01 : f32
    %10 = vector.broadcast %cst_3 : f32 to vector<16x1xf32>
    %11 = arith.divf %9, %10 : vector<16x1xf32>
    %12 = vector.broadcast %4 : vector<16x1xf32> to vector<16x32xf32>
    %13 = arith.subf %0, %12 : vector<16x32xf32>
    %cst_4 = arith.constant 9.99999974E-6 : f32
    %14 = vector.broadcast %cst_4 : f32 to vector<16x1xf32>
    %15 = arith.addf %11, %14 : vector<16x1xf32>
    %16 = math.rsqrt %15 : vector<16x1xf32>
    %17 = vector.broadcast %16 : vector<16x1xf32> to vector<16x32xf32>
    %18 = arith.mulf %13, %17 : vector<16x32xf32>
    %c0_5 = arith.constant 0 : index
    %c0_6 = arith.constant 0 : index
    %19 = vector.load %arg2[%c0_5, %c0_6] : memref<1x32xf32, #tpu.memory_space<vmem>>, vector<1x32xf32>
    %20 = vector.broadcast %19 : vector<1x32xf32> to vector<16x32xf32>
    %21 = arith.mulf %18, %20 : vector<16x32xf32>
    %c0_7 = arith.constant 0 : index
    %c0_8 = arith.constant 0 : index
    %22 = vector.load %arg3[%c0_7, %c0_8] : memref<1x32xf32, #tpu.memory_space<vmem>>, vector<1x32xf32>
    %23 = vector.broadcast %22 : vector<1x32xf32> to vector<16x32xf32>
    %24 = arith.addf %21, %23 : vector<16x32xf32>
    %25 = arith.truncf %24 : vector<16x32xf32> to vector<16x32xbf16>
    %c0_9 = arith.constant 0 : index
    %c0_10 = arith.constant 0 : index
    %26 = vector.load %arg4[%c0_9, %c0_10] : memref<32x96xbf16, #tpu.memory_space<vmem>>, vector<32x96xbf16>
    %cst_11 = arith.constant dense<0.000000e+00> : vector<16x96xf32>
    %27 = tpu.matmul %25, %26, %cst_11 {dimension_numbers = #tpu.dot_dimension_numbers<[1], [0], [0], [1], [0, 0, 1, 1], [], []>} : vector<16x32xbf16>, vector<32x96xbf16>, vector<16x96xf32> -> vector<16x96xf32>
    %c0_12 = arith.constant 0 : index
    %c0_13 = arith.constant 0 : index
    %28 = vector.load %arg5[%c0_12, %c0_13] : memref<1x96xf32, #tpu.memory_space<vmem>>, vector<1x96xf32>
    %29 = vector.broadcast %28 : vector<1x96xf32> to vector<16x96xf32>
    %30 = arith.addf %27, %29 : vector<16x96xf32>
    %c0_14 = arith.constant 0 : index
    %c0_15 = arith.constant 0 : index
    %31 = vector.load %arg6[%c0_14, %c0_15] : memref<16x96xf32, #tpu.memory_space<vmem>>, vector<16x96xf32>
    tpu.vector_store %arg6[%c0_14, %c0_15], %30 {strides = array<i32>} : memref<16x96xf32, #tpu.memory_space<vmem>>, vector<16x96xf32>,
    return
  }
  func.func @transform_0(%arg0: i32) -> (i32, i32) {
    %c0_i32 = arith.constant 0 : i32
    %c0_i32_0 = arith.constant 0 : i32
    return %arg0, %c0_i32 : i32, i32
  }
  func.func @transform_1(%arg0: i32) -> (i32, i32) {
    %c0_i32 = arith.constant 0 : i32
    %c0_i32_0 = arith.constant 0 : i32
    %c0_i32_1 = arith.constant 0 : i32
    return %c0_i32, %c0_i32_0 : i32, i32
  }
  func.func @transform_2(%arg0: i32) -> (i32, i32) {
    %c0_i32 = arith.constant 0 : i32
    %c0_i32_0 = arith.constant 0 : i32
    %c0_i32_1 = arith.constant 0 : i32
    return %c0_i32, %c0_i32_0 : i32, i32
  }
  func.func @transform_3(%arg0: i32) -> (i32, i32) {
    %c0_i32 = arith.constant 0 : i32
    %c0_i32_0 = arith.constant 0 : i32
    %c0_i32_1 = arith.constant 0 : i32
    return %c0_i32, %c0_i32_0 : i32, i32
  }
  func.func @transform_4(%arg0: i32) -> (i32, i32) {
    %c0_i32 = arith.constant 0 : i32
    %c0_i32_0 = arith.constant 0 : i32
    %c0_i32_1 = arith.constant 0 : i32
    return %c0_i32, %c0_i32_0 : i32, i32
  }
  func.func @transform_5(%arg0: i32) -> (i32, i32) {
    %c0_i32 = arith.constant 0 : i32
    %c0_i32_0 = arith.constant 0 : i32
    return %arg0, %c0_i32 : i32, i32
  }
}

</mosaic_0001>

<llo_original>
// kernel: tpu_custom_call.1
$region0: #{tpu_custom_call.1}
  #allocation0 [shape = 'u32[]', space=smem, size = 0x4, offset = 0x4, fixed_abs, tag = 'smem constant byte address 0x4 - core index']
  #allocation1 [shape = 'u32[72,128]{1,0:T(1,128)}', space=vmem, size = 0x9000, scoped, tag = 'internal scratch']
  %s0 = inlined_call_operand.hbm [shape: f32[16,32], index: 0, kind: input, shape index: {}]
  %s1 = inlined_call_operand.hbm [shape: f32[1,32], index: 1, kind: input, shape index: {}]
  %s2 = inlined_call_operand.vmem [shape: f32[1,32], index: 2, kind: input, shape index: {}]
  %s3 = inlined_call_operand.hbm [shape: bf16[32,96], index: 3, kind: input, shape index: {}]
  %s4 = inlined_call_operand.vmem [shape: f32[1,96], index: 4, kind: input, shape index: {}]
  %s5 = inlined_call_operand.hbm [shape: f32[16,96], index: 5, kind: output, shape index: {}]
  %s6 = sld [smem:[#allocation0]]
  $region42: #{tpu_custom_call.1} parent=0
    _
  %s8 = ssub.s32 1, %s6
  %s9 = scalar_select 0, %s8, %s6
  $region1: #{tpu_custom_call.1} parent=0
    #allocation2 [shape = 'u8[8192]{0}', space=vmem, size = 0x2000, scoped, tag = 'input window, operand 0, single buffered']
    #allocation3 [shape = 's32[1]{0}', space=sflag, size = 0x4, scoped, tag = 'scoped memory for tpu_custom_call.1']
    #allocation4 [shape = 's32[1]{0}', space=sflag, size = 0x4, scoped, tag = 'scoped memory for tpu_custom_call.1']
    #allocation5 [shape = 'u8[512]{0}', space=vmem, size = 0x400, scoped, tag = 'input window, operand 1, single buffered']
    #allocation6 [shape = 's32[1]{0}', space=sflag, size = 0x4, scoped, tag = 'scoped memory for tpu_custom_call.1']
    #allocation7 [shape = 'u8[8192]{0}', space=vmem, size = 0x2000, scoped, tag = 'input window, operand 3, single buffered']
    #allocation8 [shape = 'u8[8192]{0}', space=vmem, size = 0x2000, scoped, tag = 'output window, operand 0, single buffered']
    %10 = vsyncpa [#allocation3], 0
    %11 = vsyncpa [#allocation6], 0
    %12 = vsyncpa [#allocation4], 0
    // Predicated region
    $region2: #{tpu_custom_call.1} parent=1 // pred_check
      _
    $region3: #{tpu_custom_call.1} parent=1 // pred_check_branch
      %14 = sbr.rel (0) target = $region5
    $region4: #{tpu_custom_call.1} parent=1 // pred_region
      %16 = vsyncadd [#allocation3], 0
      %s17 = sshll.u32 %s0, 4
      %s18 = int_to_ptr.hbm [resolvable:$true] %s17
      %s19 = sshll.u32 [#allocation2], 4
      %s20 = int_to_ptr.vmem [resolvable:$true] %s19
      %25 = dma.hbm_to_vmem [thread:$0]  %s18, 256, %s20, [#allocation3], 128, 128, 8
    $region5: #{tpu_custom_call.1} parent=1 // pred_fallthru
      _
    // Predicated region
    $region6: #{tpu_custom_call.1} parent=1 // pred_check
      _
    $region7: #{tpu_custom_call.1} parent=1 // pred_check_branch
      %27 = sbr.rel (0) target = $region9
    $region8: #{tpu_custom_call.1} parent=1 // pred_region
      %29 = vsyncadd [#allocation6], 0
      %s31 = sshll.u32 %s1, 4
      %s32 = int_to_ptr.hbm [resolvable:$true] %s31
      %s33 = sshll.u32 [#allocation5], 4
      %s34 = int_to_ptr.vmem [resolvable:$true] %s33
      %36 = dma.hbm_to_vmem [thread:$0]  %s32, 16, %s34, [#allocation6]
    $region9: #{tpu_custom_call.1} parent=1 // pred_fallthru
      _
    // Predicated region
    $region10: #{tpu_custom_call.1} parent=1 // pred_check
      _
    $region11: #{tpu_custom_call.1} parent=1 // pred_check_branch
      %38 = sbr.rel (0) target = $region13
    $region12: #{tpu_custom_call.1} parent=1 // pred_region
      _
    $region13: #{tpu_custom_call.1} parent=1 // pred_fallthru
      _
    // Predicated region
    $region14: #{tpu_custom_call.1} parent=1 // pred_check
      _
    $region15: #{tpu_custom_call.1} parent=1 // pred_check_branch
      %40 = sbr.rel (0) target = $region17
    $region16: #{tpu_custom_call.1} parent=1 // pred_region
      %42 = vsyncadd [#allocation6], 0
      %s43 = sshll.u32 %s3, 4
      %s44 = int_to_ptr.hbm [resolvable:$true] %s43
      %s45 = sshll.u32 [#allocation7], 4
      %s46 = int_to_ptr.vmem [resolvable:$true] %s45
      %51 = dma.hbm_to_vmem [thread:$0]  %s44, 256, %s46, [#allocation6], 64, 64, 4
    $region17: #{tpu_custom_call.1} parent=1 // pred_fallthru
      _
    // Predicated region
    $region18: #{tpu_custom_call.1} parent=1 // pred_check
      _
    $region19: #{tpu_custom_call.1} parent=1 // pred_check_branch
      %53 = sbr.rel (0) target = $region21
    $region20: #{tpu_custom_call.1} parent=1 // pred_region
      _
    $region21: #{tpu_custom_call.1} parent=1 // pred_fallthru
      _
    // Predicated region
    $region22: #{tpu_custom_call.1} parent=1 // pred_check
      _
    $region23: #{tpu_custom_call.1} parent=1 // pred_check_branch
      %55 = sbr.rel (0) target = $region25
    $region24: #{tpu_custom_call.1} parent=1 // pred_region
      %57 = dma.done [#allocation3], 256
    $region25: #{tpu_custom_call.1} parent=1 // pred_fallthru
      _
    // Predicated region
    $region26: #{tpu_custom_call.1} parent=1 // pred_check
      _
    $region27: #{tpu_custom_call.1} parent=1 // pred_check_branch
      %59 = sbr.rel (0) target = $region29
    $region28: #{tpu_custom_call.1} parent=1 // pred_region
      %61 = dma.done [#allocation6], 16
    $region29: #{tpu_custom_call.1} parent=1 // pred_fallthru
      _
    // Predicated region
    $region30: #{tpu_custom_call.1} parent=1 // pred_check
      _
    $region31: #{tpu_custom_call.1} parent=1 // pred_check_branch
      %63 = sbr.rel (0) target = $region33
    $region32: #{tpu_custom_call.1} parent=1 // pred_region
      %65 = dma.done [#allocation6], 256
    $region33: #{tpu_custom_call.1} parent=1 // pred_fallthru
      _
    %v67 = vld [vmem:[#allocation2] sm:$0xff]
    %v68 = vld [vmem:[#allocation2 + $0x8] sm:$0xff]
    %vm69 = vcmask 261120
    %v70 = vsel %vm69, %v67, 0.0
    %71 = vadd.xlane.f32.xlu0 %v70
    %v72 = vpop.xlane.xlu0 %71
    %v73 = vsel %vm69, %v68, 0.0
    %74 = vadd.xlane.f32.xlu0 %v73
    %v75 = vpop.xlane.xlu0 %74
    %v76 = vrcp.pop 32.0
    %v77 = vmul.f32 32.0, %v76
    %v78 = vsub.f32 1.0, %v77
    %v79 = vmul.f32 %v76, %v78
    %v80 = vadd.f32 %v76, %v79
    %vm81 = vweird.f32 %v76
    %v82 = vsel %vm81, %v76, %v80
    %v83 = vmul.f32 %v72, %v82
    %v84 = vmul.f32 %v75, %v82
    %v85 = vsub.f32 %v67, %v83
    %v86 = vsub.f32 %v68, %v84
    %v87 = vmul.f32 %v85, %v85
    %v88 = vmul.f32 %v86, %v86
    %v89 = vsel %vm69, %v87, 0.0
    %90 = vadd.xlane.f32.xlu0 %v89
    %v91 = vpop.xlane.xlu0 %90
    %v92 = vsel %vm69, %v88, 0.0
    %93 = vadd.xlane.f32.xlu0 %v92
    %v94 = vpop.xlane.xlu0 %93
    %v95 = vmul.f32 %v91, %v82
    %v96 = vmul.f32 %v94, %v82
    %v97 = vadd.f32 %v95, 1e-05
    %v98 = vadd.f32 %v96, 1e-05
    %v99 = vrsqrt.pop %v97
    %v100 = vmul.f32 %v99, %v97
    %v101 = vmul.f32 %v100, %v99
    %v102 = vmul.f32 0.5, %v101
    %v103 = vsub.f32 1.5, %v102
    %v104 = vmul.f32 %v99, %v103
    %vm105 = vweird.f32 %v97
    %vm106 = vweird.f32 %v99
    %vm107 = vmor %vm105, %vm106
    %v108 = vsel %vm107, %v99, %v104
    %v109 = vrsqrt.pop %v98
    %v110 = vmul.f32 %v109, %v98
    %v111 = vmul.f32 %v110, %v109
    %v112 = vmul.f32 0.5, %v111
    %v113 = vsub.f32 1.5, %v112
    %v114 = vmul.f32 %v109, %v113
    %vm115 = vweird.f32 %v98
    %vm116 = vweird.f32 %v109
    %vm117 = vmor %vm115, %vm116
    %v118 = vsel %vm117, %v109, %v114
    %v119 = vmul.f32 %v85, %v108
    %v120 = vmul.f32 %v86, %v118
    %v121 = vld [vmem:[#allocation5] sm:$0x1]
    %v123 = vperm.slane %v121, 0
    %v125 = vmul.f32 %v119, %v123
    %v126 = vmul.f32 %v120, %v123
    %v127 = vld [vmem:[%s2] sm:$0x1]
    %v129 = vperm.slane %v127, 0
    %v131 = vadd.f32 %v125, %v129
    %v132 = vadd.f32 %v126, %v129
    %v133 = vpack.c.bf16 %v132, %v131
    %v134 = vld [vmem:[#allocation7] sm:$0xf]
    %v135 = vld [vmem:[#allocation7 + $0x4] sm:$0xf]
    %v136 = vld [vmem:[#allocation7 + $0x8] sm:$0xf]
    %v137 = vld [vmem:[#allocation7 + $0xc] sm:$0xf]
    %v138 = vld [vmem:[%s4] sm:$0x1]
    %v140 = vperm.slane %v138, 0
    %v146 = vunpack.c.l.b16 %v134
    %v147 = vunpack.c.l.b16 %v135
    %v148 = vunpack.c.l.b16 %v136
    %v149 = vunpack.c.l.b16 %v137
    %v150 = vpack.c.b16 %v147, %v146
    %v151 = vpack.c.b16 %v149, %v148
    %v155 = vsel %vm69, %v133, 0
    %157 = vmatpush.bf16.msra.mxu0 0
    %158 = vmatpush.bf16.msra.mxu0 0
    %159 = vmatpush.bf16.msra.mxu0 0
    %160 = vmatpush.bf16.msra.mxu0 0
    %161 = vmatpush.bf16.msra.mxu0 0
    %162 = vmatpush.bf16.msra.mxu0 0
    %163 = vmatpush.bf16.msra.mxu0 %v151
    %164 = vmatpush.bf16.msra.mxu0 %v150
    %165 = vmatmul.bf16.gmra.mxu0 %v155
    %v166 = vpop.f32.mrf.mxu0
    %v167 = vadd.f32 %v140, %v166
    %v168 = vpop.f32.mrf.mxu0
    %v169 = vadd.f32 %v140, %v168
    %170 = vdwg.mxu0
    %vm171 = vcmask 785408
    %172 = vst.msk [vmem:[#allocation8] sm:$0xff] %vm171, %v167
    %173 = vst.msk [vmem:[#allocation8 + $0x8] sm:$0xff] %vm171, %v169
    // Predicated region
    $region34: #{tpu_custom_call.1} parent=1 // pred_check
      _
    $region35: #{tpu_custom_call.1} parent=1 // pred_check_branch
      %175 = sbr.rel (0) target = $region37
    $region36: #{tpu_custom_call.1} parent=1 // pred_region
      %177 = vsyncadd [#allocation4], 0
      %s178 = sshll.u32 [#allocation8], 4
      %s179 = int_to_ptr.vmem [resolvable:$true] %s178
      %s180 = sshll.u32 %s5, 4
      %s181 = int_to_ptr.hbm [resolvable:$true] %s180
      %186 = dma.vmem_to_hbm [thread:$0]  %s179, 256, %s181, [#allocation4], 128, 128, 8
    $region37: #{tpu_custom_call.1} parent=1 // pred_fallthru
      _
    // Predicated region
    $region38: #{tpu_custom_call.1} parent=1 // pred_check
      _
    $region39: #{tpu_custom_call.1} parent=1 // pred_check_branch
      %188 = sbr.rel (0) target = $region41
    $region40: #{tpu_custom_call.1} parent=1 // pred_region
      %190 = dma.done [#allocation4], 256
    $region41: #{tpu_custom_call.1} parent=1 // pred_fallthru
      _
    %191 = vsyncpa [#allocation3], 1
    %192 = vsyncpa [#allocation6], 1
    %193 = vsyncpa [#allocation4], 1

</llo_original>
